<compile_context>
chip_gen: v5e
topology: v5e:2x2
jax: 0.10.0
libtpu: 0.0.40
codegen_flags: <defaults>
</compile_context>

<pallas_src>
import functools

import jax
import jax.numpy as jnp
from jax.experimental import pallas as pl
from jax.experimental.pallas import tpu as pltpu


def _prox_l1l2_kernel(xk_ref, f_ref, o_ref, *, thr, factor):
    xk = xk_ref[...]
    f = f_ref[...]
    d = xk - f
    # soft-threshold: sign(d) * max(0, |d| - thr)  ==  d - clip(d, -thr, thr)
    soft = d - jnp.clip(d, -thr, thr)
    o_ref[...] = (factor * soft + f).astype(o_ref.dtype)


def prox_l1l2(xk: jax.Array, f: jax.Array, lam1: float, lam2: float,
              tau: float) -> jax.Array:
    """Pallas implementation of Prox_l1l2_f.forward(xk, f)."""
    assert xk.shape == f.shape, "xk and f must have the same shape"
    orig_shape = xk.shape
    dtype = xk.dtype
    total = xk.size

    thr = float(lam1) * float(tau)
    factor = 1.0 / (float(tau) * float(lam2) + 1.0)

    # ---- lane-dense 2D slab -------------------------------------------------
    LANE = 512  # last dim: multiple of 128 -> full-lane, unmasked stores
    rows = pl.cdiv(total, LANE)

    # ---- block sizing -------------------------------------------------------
    # Target ~2 MiB per block per array: 3 streams (2 in + 1 out) x 2 buffers
    # <= 12 MiB, safely under v5e's 16 MiB default scoped-VMEM limit.
    itemsize = jnp.dtype(dtype).itemsize
    bytes_per_row = LANE * itemsize
    target_rows = max(8, (2 * 1024 * 1024) // bytes_per_row)

    if rows <= target_rows:
        # Single row-block: block second-to-last dim == full extent (allowed
        # even if not a multiple of 8).
        tile_rows = rows
    else:
        # Multiple of 8 sublanes; tail handled by zero-padding below.
        tile_rows = max(8, (target_rows // 8) * 8)

    padded_rows = pl.cdiv(rows, tile_rows) * tile_rows
    padded_total = padded_rows * LANE

    xk_flat = xk.reshape(-1)
    f_flat = f.reshape(-1)
    if padded_total != total:
        pad = padded_total - total
        xk_flat = jnp.pad(xk_flat, (0, pad))
        f_flat = jnp.pad(f_flat, (0, pad))

    x2d = xk_flat.reshape(padded_rows, LANE)
    f2d = f_flat.reshape(padded_rows, LANE)

    grid = (padded_rows // tile_rows,)
    kernel = functools.partial(_prox_l1l2_kernel, thr=thr, factor=factor)

    block = pl.BlockSpec((tile_rows, LANE), lambda i: (i, 0))

    out2d = pl.pallas_call(
        kernel,
        out_shape=jax.ShapeDtypeStruct((padded_rows, LANE), dtype),
        grid_spec=pltpu.PrefetchScalarGridSpec(
            num_scalar_prefetch=0,
            grid=grid,
            in_specs=[block, block],
            out_specs=pl.BlockSpec((tile_rows, LANE), lambda i: (i, 0)),
        ),
        compiler_params=pltpu.CompilerParams(
            dimension_semantics=("parallel",),
        ),
    )(x2d, f2d)

    return out2d.reshape(-1)[:total].reshape(orig_shape)


def prox_l1l2_ref(xk: jax.Array, f: jax.Array, lam1: float, lam2: float,
                  tau: float) -> jax.Array:
    """Pure-JAX reference mirroring the PyTorch forward exactly."""
    factor = 1.0 / (tau * lam2 + 1.0)
    d = xk - f
    return factor * jnp.maximum(0.0, jnp.abs(d) - lam1 * tau) * jnp.sign(d) + f


if __name__ == "__main__":
    key = jax.random.PRNGKey(0)
    k1, k2 = jax.random.split(key)

    # Small NCHW-style inputs: xk (current iterate) and f (noisy image).
    xk = jax.random.normal(k1, (2, 4, 16, 16), dtype=jnp.float32) * 2.0
    f = jax.random.normal(k2, (2, 4, 16, 16), dtype=jnp.float32) * 2.0

    lam1, lam2, tau = 0.5, 0.1, 1.0

    out = prox_l1l2(xk, f, lam1, lam2, tau)
    out = jax.block_until_ready(out)

    ref = prox_l1l2_ref(xk, f, lam1, lam2, tau)
    assert out.shape == xk.shape and out.dtype == xk.dtype
    assert jnp.allclose(out, ref, atol=1e-6, rtol=1e-6), "mismatch vs reference"

    print("KERNEL_OK")
</pallas_src>

<mosaic_0001>
module attributes {stable_mosaic.version = 11 : i64} {
  func.func @_prox_l1l2_kernel(%arg0: i32, %arg1: memref<4x512xf32, #tpu.memory_space<vmem>>, %arg2: memref<4x512xf32, #tpu.memory_space<vmem>>, %arg3: memref<4x512xf32, #tpu.memory_space<vmem>>) attributes {dimension_semantics = [#tpu.dimension_semantics<parallel>], iteration_bounds = array<i64: 1>, scalar_prefetch = 0 : i64, scratch_operands = 0 : i64, tpu.core_type = #tpu.core_type<tc>, window_params = [{transform_indices = @transform_0, window_bounds = array<i64: 4, 512>}, {transform_indices = @transform_1, window_bounds = array<i64: 4, 512>}, {transform_indices = @transform_2, window_bounds = array<i64: 4, 512>}]} {
    %c0 = arith.constant 0 : index
    %c0_0 = arith.constant 0 : index
    %0 = vector.load %arg1[%c0, %c0_0] : memref<4x512xf32, #tpu.memory_space<vmem>>, vector<4x512xf32>
    %c0_1 = arith.constant 0 : index
    %c0_2 = arith.constant 0 : index
    %1 = vector.load %arg2[%c0_1, %c0_2] : memref<4x512xf32, #tpu.memory_space<vmem>>, vector<4x512xf32>
    %2 = arith.subf %0, %1 : vector<4x512xf32>
    %cst = arith.constant -5.000000e-01 : f32
    %cst_3 = arith.constant 5.000000e-01 : f32
    %3 = vector.broadcast %cst : f32 to vector<4x512xf32>
    %4 = arith.maximumf %3, %2 : vector<4x512xf32>
    %5 = vector.broadcast %cst_3 : f32 to vector<4x512xf32>
    %6 = arith.minimumf %5, %4 : vector<4x512xf32>
    %7 = arith.subf %2, %6 : vector<4x512xf32>
    %cst_4 = arith.constant 0.909090936 : f32
    %8 = vector.broadcast %cst_4 : f32 to vector<4x512xf32>
    %9 = arith.mulf %8, %7 : vector<4x512xf32>
    %10 = arith.addf %9, %1 : vector<4x512xf32>
    %c0_5 = arith.constant 0 : index
    %c0_6 = arith.constant 0 : index
    %11 = vector.load %arg3[%c0_5, %c0_6] : memref<4x512xf32, #tpu.memory_space<vmem>>, vector<4x512xf32>
    tpu.vector_store %arg3[%c0_5, %c0_6], %10 {strides = array<i32>} : memref<4x512xf32, #tpu.memory_space<vmem>>, vector<4x512xf32>,
    return
  }
  func.func @transform_0(%arg0: i32) -> (i32, i32) {
    %c0_i32 = arith.constant 0 : i32
    %c0_i32_0 = arith.constant 0 : i32
    return %arg0, %c0_i32 : i32, i32
  }
  func.func @transform_1(%arg0: i32) -> (i32, i32) {
    %c0_i32 = arith.constant 0 : i32
    %c0_i32_0 = arith.constant 0 : i32
    return %arg0, %c0_i32 : i32, i32
  }
  func.func @transform_2(%arg0: i32) -> (i32, i32) {
    %c0_i32 = arith.constant 0 : i32
    %c0_i32_0 = arith.constant 0 : i32
    return %arg0, %c0_i32 : i32, i32
  }
}

</mosaic_0001>

<llo_original>
// kernel: tpu_custom_call.1
$region0: #{tpu_custom_call.1}
  #allocation0 [shape = 'u32[]', space=smem, size = 0x4, offset = 0x4, fixed_abs, tag = 'smem constant byte address 0x4 - core index']
  #allocation1 [shape = 'u32[72,128]{1,0:T(1,128)}', space=vmem, size = 0x9000, scoped, tag = 'internal scratch']
  %s0 = inlined_call_operand.hbm [shape: f32[4,512], index: 0, kind: input, shape index: {}]
  %s1 = inlined_call_operand.hbm [shape: f32[4,512], index: 1, kind: input, shape index: {}]
  %s2 = inlined_call_operand.hbm [shape: f32[4,512], index: 2, kind: output, shape index: {}]
  %s3 = sld [smem:[#allocation0]]
  $region26: #{tpu_custom_call.1} parent=0
    _
  %s5 = ssub.s32 1, %s3
  %s6 = scalar_select 0, %s5, %s3
  $region1: #{tpu_custom_call.1} parent=0
    #allocation2 [shape = 'u8[8192]{0}', space=vmem, size = 0x2000, scoped, tag = 'input window, operand 0, single buffered']
    #allocation3 [shape = 's32[1]{0}', space=sflag, size = 0x4, scoped, tag = 'scoped memory for tpu_custom_call.1']
    #allocation4 [shape = 's32[1]{0}', space=sflag, size = 0x4, scoped, tag = 'scoped memory for tpu_custom_call.1']
    #allocation5 [shape = 'u8[8192]{0}', space=vmem, size = 0x2000, scoped, tag = 'input window, operand 1, single buffered']
    #allocation6 [shape = 's32[1]{0}', space=sflag, size = 0x4, scoped, tag = 'scoped memory for tpu_custom_call.1']
    #allocation7 [shape = 'u8[8192]{0}', space=vmem, size = 0x2000, scoped, tag = 'output window, operand 0, single buffered']
    %7 = vsyncpa [#allocation3], 0
    %8 = vsyncpa [#allocation6], 0
    %9 = vsyncpa [#allocation4], 0
    // Predicated region
    $region2: #{tpu_custom_call.1} parent=1 // pred_check
      _
    $region3: #{tpu_custom_call.1} parent=1 // pred_check_branch
      %11 = sbr.rel (0) target = $region5
    $region4: #{tpu_custom_call.1} parent=1 // pred_region
      %13 = vsyncadd [#allocation3], 0
      %s15 = sshll.u32 %s0, 4
      %s16 = int_to_ptr.hbm [resolvable:$true] %s15
      %s17 = sshll.u32 [#allocation2], 4
      %s18 = int_to_ptr.vmem [resolvable:$true] %s17
      %20 = dma.hbm_to_vmem [thread:$0]  %s16, 256, %s18, [#allocation3]
    $region5: #{tpu_custom_call.1} parent=1 // pred_fallthru
      _
    // Predicated region
    $region6: #{tpu_custom_call.1} parent=1 // pred_check
      _
    $region7: #{tpu_custom_call.1} parent=1 // pred_check_branch
      %22 = sbr.rel (0) target = $region9
    $region8: #{tpu_custom_call.1} parent=1 // pred_region
      %24 = vsyncadd [#allocation6], 0
      %s26 = sshll.u32 %s1, 4
      %s27 = int_to_ptr.hbm [resolvable:$true] %s26
      %s28 = sshll.u32 [#allocation5], 4
      %s29 = int_to_ptr.vmem [resolvable:$true] %s28
      %31 = dma.hbm_to_vmem [thread:$0]  %s27, 256, %s29, [#allocation6]
    $region9: #{tpu_custom_call.1} parent=1 // pred_fallthru
      _
    // Predicated region
    $region10: #{tpu_custom_call.1} parent=1 // pred_check
      _
    $region11: #{tpu_custom_call.1} parent=1 // pred_check_branch
      %33 = sbr.rel (0) target = $region13
    $region12: #{tpu_custom_call.1} parent=1 // pred_region
      %35 = dma.done [#allocation3], 256
    $region13: #{tpu_custom_call.1} parent=1 // pred_fallthru
      _
    // Predicated region
    $region14: #{tpu_custom_call.1} parent=1 // pred_check
      _
    $region15: #{tpu_custom_call.1} parent=1 // pred_check_branch
      %37 = sbr.rel (0) target = $region17
    $region16: #{tpu_custom_call.1} parent=1 // pred_region
      %39 = dma.done [#allocation6], 256
    $region17: #{tpu_custom_call.1} parent=1 // pred_fallthru
      _
    %v40 = vld [vmem:[#allocation2] sm:$0xff]
    %v41 = vld [vmem:[#allocation2 + $0x8] sm:$0xff]
    %v42 = vld [vmem:[#allocation5] sm:$0xff]
    %v43 = vld [vmem:[#allocation5 + $0x8] sm:$0xff]
    %v44 = vsub.f32 %v40, %v42
    %v45 = vsub.f32 %v41, %v43
    %v46 = vmax.f32 %v44, -0.5
    %v47 = vmax.f32 %v45, -0.5
    %v48 = vmin.f32 %v46, 0.5
    %v49 = vmin.f32 %v47, 0.5
    %v50 = vsub.f32 %v44, %v48
    %v51 = vsub.f32 %v45, %v49
    %v52 = vmul.f32 %v50, 0.90909094
    %v53 = vmul.f32 %v51, 0.90909094
    %v54 = vadd.f32 %v52, %v42
    %v55 = vadd.f32 %v53, %v43
    %56 = vst [vmem:[#allocation7] sm:$0xff] %v54
    %57 = vst [vmem:[#allocation7 + $0x8] sm:$0xff] %v55
    // Predicated region
    $region18: #{tpu_custom_call.1} parent=1 // pred_check
      _
    $region19: #{tpu_custom_call.1} parent=1 // pred_check_branch
      %59 = sbr.rel (0) target = $region21
    $region20: #{tpu_custom_call.1} parent=1 // pred_region
      %61 = vsyncadd [#allocation4], 0
      %s63 = sshll.u32 [#allocation7], 4
      %s64 = int_to_ptr.vmem [resolvable:$true] %s63
      %s65 = sshll.u32 %s2, 4
      %s66 = int_to_ptr.hbm [resolvable:$true] %s65
      %68 = dma.vmem_to_hbm [thread:$0]  %s64, 256, %s66, [#allocation4]
    $region21: #{tpu_custom_call.1} parent=1 // pred_fallthru
      _
    // Predicated region
    $region22: #{tpu_custom_call.1} parent=1 // pred_check
      _
    $region23: #{tpu_custom_call.1} parent=1 // pred_check_branch
      %70 = sbr.rel (0) target = $region25
    $region24: #{tpu_custom_call.1} parent=1 // pred_region
      %72 = dma.done [#allocation4], 256
    $region25: #{tpu_custom_call.1} parent=1 // pred_fallthru
      _
    %73 = vsyncpa [#allocation3], 1
    %74 = vsyncpa [#allocation6], 1
    %75 = vsyncpa [#allocation4], 1

</llo_original>
